<compile_context>
chip_gen: v6e
topology: v6e:2x2x1
jax: 0.10.0
libtpu: 0.0.40
codegen_flags: <defaults>
</compile_context>

<pallas_src>
import functools

import jax
import jax.numpy as jnp
from jax.experimental import pallas as pl
from jax.experimental.pallas import tpu as pltpu


def _ls_ce_kernel(x_ref, t_ref, out_ref, *, smoothing):
    """One grid step: (tile_rows, C) logits + (tile_rows, 1) targets -> per-row loss."""
    confidence = 1.0 - smoothing

    x = x_ref[...].astype(jnp.float32)                   # (tb, C)  widen in-register
    c = x.shape[-1]

    # Numerically stable logsumexp pieces.
    m = jnp.max(x, axis=-1, keepdims=True)               # (tb, 1)  XLU
    shifted = x - m                                       # (tb, C)  VPU
    lse = jnp.log(jnp.sum(jnp.exp(shifted), axis=-1, keepdims=True))  # (tb, 1) EUP+XLU

    # Gather shifted[target] via a select + lane-sum (no logprobs tensor),
    # plus the plain lane-sum needed for the smoothing term.
    tgt = t_ref[...]                                      # (tb, 1) int32
    cls = jax.lax.broadcasted_iota(jnp.int32, x.shape, 1)
    picked = jnp.sum(jnp.where(cls == tgt, shifted, 0.0),
                     axis=-1, keepdims=True)              # (tb, 1)
    ssum = jnp.sum(shifted, axis=-1, keepdims=True)       # (tb, 1)

    # loss = confidence*(lse - shifted[tgt]) + smoothing*(lse - mean(shifted))
    out_ref[...] = lse - (confidence * picked + (smoothing / c) * ssum)


def _pick_tile_rows(n, c, itemsize, target_bytes=4 * 1024 * 1024):
    """Largest multiple-of-8 row count dividing n with a ~target_bytes input tile."""
    target = max(8, (target_bytes // (itemsize * c)) // 8 * 8)
    if n <= target or n % 8 != 0:
        return n                       # small / oddly shaped batch: single block
    t = min(target, n)
    t -= t % 8
    while t >= 8 and n % t != 0:
        t -= 8
    return t if t >= 8 else n


def label_smoothing_cross_entropy(x, target, smoothing=0.1, tile_rows=None):
    """x: (N, C) float logits (f32 or bf16); target: (N,) int ids. Returns scalar f32."""
    n, c = x.shape
    if tile_rows is None:
        tile_rows = _pick_tile_rows(n, c, jnp.dtype(x.dtype).itemsize)
    assert n % tile_rows == 0, (n, tile_rows)
    n_tiles = n // tile_rows

    t2d = target.astype(jnp.int32).reshape(n, 1)
    kernel = functools.partial(_ls_ce_kernel, smoothing=float(smoothing))

    per_row = pl.pallas_call(
        kernel,
        out_shape=jax.ShapeDtypeStruct((n, 1), jnp.float32),
        grid_spec=pltpu.PrefetchScalarGridSpec(
            num_scalar_prefetch=0,
            grid=(n_tiles,),
            in_specs=[
                pl.BlockSpec((tile_rows, c), lambda i: (i, 0)),
                pl.BlockSpec((tile_rows, 1), lambda i: (i, 0)),
            ],
            out_specs=pl.BlockSpec((tile_rows, 1), lambda i: (i, 0)),
        ),
        compiler_params=pltpu.CompilerParams(
            dimension_semantics=("parallel",),
        ),
    )(x, t2d)

    # Tiny cross-row reduction + mean in the wrapper.
    return jnp.sum(per_row) / jnp.float32(n)


def _reference(x, target, smoothing=0.1):
    confidence = 1.0 - smoothing
    logprobs = jax.nn.log_softmax(x.astype(jnp.float32), axis=-1)
    nll = -jnp.take_along_axis(logprobs, target[:, None], axis=-1)[:, 0]
    smooth = -jnp.mean(logprobs, axis=-1)
    return jnp.mean(confidence * nll + smoothing * smooth)


if __name__ == "__main__":
    key = jax.random.PRNGKey(0)
    kx, kt = jax.random.split(key)
    N, C = 64, 128                       # small batch, classes on the lane axis
    x = jax.random.normal(kx, (N, C), dtype=jnp.float32)
    target = jax.random.randint(kt, (N,), 0, C, dtype=jnp.int32)

    ref = _reference(x, target, smoothing=0.1)

    # Default (auto) tiling: whole batch fits one block here.
    loss = label_smoothing_cross_entropy(x, target, smoothing=0.1)
    loss = jax.block_until_ready(loss)
    assert jnp.allclose(loss, ref, atol=1e-5, rtol=1e-5), (loss, ref)

    # Explicit small tiles: exercises the multi-tile / pipelined path.
    loss_tiled = label_smoothing_cross_entropy(x, target, smoothing=0.1,
                                               tile_rows=8)
    loss_tiled = jax.block_until_ready(loss_tiled)
    assert jnp.allclose(loss_tiled, ref, atol=1e-5, rtol=1e-5), (loss_tiled, ref)

    # bf16 logits: kernel widens in-register; looser tolerance.
    xb = x.astype(jnp.bfloat16)
    ref_b = _reference(xb, target, smoothing=0.1)
    loss_b = label_smoothing_cross_entropy(xb, target, smoothing=0.1)
    loss_b = jax.block_until_ready(loss_b)
    assert jnp.allclose(loss_b, ref_b, atol=2e-3, rtol=2e-3), (loss_b, ref_b)

    print("KERNEL_OK")
</pallas_src>

<mosaic_0001>
module attributes {stable_mosaic.version = 11 : i64} {
  func.func @_ls_ce_kernel(%arg0: i32, %arg1: memref<64x128xf32, #tpu.memory_space<vmem>>, %arg2: memref<64x1xi32, #tpu.memory_space<vmem>>, %arg3: memref<64x1xf32, #tpu.memory_space<vmem>>) attributes {dimension_semantics = [#tpu.dimension_semantics<parallel>], iteration_bounds = array<i64: 1>, scalar_prefetch = 0 : i64, scratch_operands = 0 : i64, tpu.core_type = #tpu.core_type<tc>, window_params = [{transform_indices = @transform_0, window_bounds = array<i64: 64, 128>}, {transform_indices = @transform_1, window_bounds = array<i64: 64, 1>}, {transform_indices = @transform_2, window_bounds = array<i64: 64, 1>}]} {
    %c0 = arith.constant 0 : index
    %c0_0 = arith.constant 0 : index
    %0 = vector.load %arg1[%c0, %c0_0] : memref<64x128xf32, #tpu.memory_space<vmem>>, vector<64x128xf32>
    %cst = arith.constant dense<0xFF800000> : vector<64xf32>
    %1 = vector.multi_reduction <maximumf>, %0, %cst [1] : vector<64x128xf32> to vector<64xf32>
    %2 = vector.shape_cast %1 : vector<64xf32> to vector<64x1xf32>
    %3 = vector.broadcast %2 : vector<64x1xf32> to vector<64x128xf32>
    %4 = arith.subf %0, %3 : vector<64x128xf32>
    %5 = math.exp %4 : vector<64x128xf32>
    %cst_1 = arith.constant dense<0.000000e+00> : vector<64xf32>
    %6 = vector.multi_reduction <add>, %5, %cst_1 [1] : vector<64x128xf32> to vector<64xf32>
    %7 = vector.shape_cast %6 : vector<64xf32> to vector<64x1xf32>
    %8 = math.log %7 : vector<64x1xf32>
    %c0_2 = arith.constant 0 : index
    %c0_3 = arith.constant 0 : index
    %9 = vector.load %arg2[%c0_2, %c0_3] : memref<64x1xi32, #tpu.memory_space<vmem>>, vector<64x1xi32>
    %10 = tpu.iota {dimensions = array<i32: 1>} : vector<64x128xi32>
    %11 = vector.broadcast %9 : vector<64x1xi32> to vector<64x128xi32>
    %12 = arith.cmpi eq, %10, %11 : vector<64x128xi32>
    %cst_4 = arith.constant 0.000000e+00 : f32
    %13 = vector.broadcast %cst_4 : f32 to vector<64x128xf32>
    %14 = arith.select %12, %4, %13 : vector<64x128xi1>, vector<64x128xf32>
    %cst_5 = arith.constant dense<0.000000e+00> : vector<64xf32>
    %15 = vector.multi_reduction <add>, %14, %cst_5 [1] : vector<64x128xf32> to vector<64xf32>
    %16 = vector.shape_cast %15 : vector<64xf32> to vector<64x1xf32>
    %cst_6 = arith.constant dense<0.000000e+00> : vector<64xf32>
    %17 = vector.multi_reduction <add>, %4, %cst_6 [1] : vector<64x128xf32> to vector<64xf32>
    %18 = vector.shape_cast %17 : vector<64xf32> to vector<64x1xf32>
    %cst_7 = arith.constant 0.899999976 : f32
    %19 = vector.broadcast %cst_7 : f32 to vector<64x1xf32>
    %20 = arith.mulf %19, %16 : vector<64x1xf32>
    %cst_8 = arith.constant 7.812500e-04 : f32
    %21 = vector.broadcast %cst_8 : f32 to vector<64x1xf32>
    %22 = arith.mulf %21, %18 : vector<64x1xf32>
    %23 = arith.addf %20, %22 : vector<64x1xf32>
    %24 = arith.subf %8, %23 : vector<64x1xf32>
    %c0_9 = arith.constant 0 : index
    %c0_10 = arith.constant 0 : index
    %25 = vector.load %arg3[%c0_9, %c0_10] : memref<64x1xf32, #tpu.memory_space<vmem>>, vector<64x1xf32>
    tpu.vector_store %arg3[%c0_9, %c0_10], %24 {strides = array<i32>} : memref<64x1xf32, #tpu.memory_space<vmem>>, vector<64x1xf32>,
    return
  }
  func.func @transform_0(%arg0: i32) -> (i32, i32) {
    %c0_i32 = arith.constant 0 : i32
    %c0_i32_0 = arith.constant 0 : i32
    return %arg0, %c0_i32 : i32, i32
  }
  func.func @transform_1(%arg0: i32) -> (i32, i32) {
    %c0_i32 = arith.constant 0 : i32
    %c0_i32_0 = arith.constant 0 : i32
    return %arg0, %c0_i32 : i32, i32
  }
  func.func @transform_2(%arg0: i32) -> (i32, i32) {
    %c0_i32 = arith.constant 0 : i32
    %c0_i32_0 = arith.constant 0 : i32
    return %arg0, %c0_i32 : i32, i32
  }
}

</mosaic_0001>

<llo_original>
// kernel: tpu_custom_call.1
$region0: #{tpu_custom_call.1}
  #allocation0 [shape = 'u32[]', space=smem, size = 0x4, offset = 0x4, fixed_abs, tag = 'smem constant byte address 0x4 - core index']
  #allocation1 [shape = 'u32[144,128]{1,0:T(1,128)}', space=vmem, size = 0x12000, scoped, tag = 'internal scratch']
  %s0 = inlined_call_operand.vmem [shape: f32[64,128], index: 0, kind: input, shape index: {}]
  %s1 = inlined_call_operand.vmem [shape: s32[64,1], index: 1, kind: input, shape index: {}]
  %s2 = inlined_call_operand.vmem [shape: f32[64,1], index: 2, kind: output, shape index: {}]
  %s3 = sld [smem:[#allocation0]]
  $region18: #{tpu_custom_call.1} parent=0
    _
  %s5 = ssub.s32 1, %s3
  %s6 = scalar_select 0, %s5, %s3
  // Predicated region
  $region2: #{tpu_custom_call.1} parent=0 // pred_check
    _
  $region3: #{tpu_custom_call.1} parent=0 // pred_check_branch
    %8 = sbr.rel (0) target = $region5
  $region4: #{tpu_custom_call.1} parent=0 // pred_region
    _
  $region5: #{tpu_custom_call.1} parent=0 // pred_fallthru
    _
  // Predicated region
  $region6: #{tpu_custom_call.1} parent=0 // pred_check
    _
  $region7: #{tpu_custom_call.1} parent=0 // pred_check_branch
    %10 = sbr.rel (0) target = $region9
  $region8: #{tpu_custom_call.1} parent=0 // pred_region
    _
  $region9: #{tpu_custom_call.1} parent=0 // pred_fallthru
    _
  %v11 = vld [vmem:[%s0] sm:$0xff]
  %v12 = vld [vmem:[%s0 + $0x8] sm:$0xff]
  %v13 = vld [vmem:[%s0 + $0x10] sm:$0xff]
  %v14 = vld [vmem:[%s0 + $0x18] sm:$0xff]
  %v15 = vld [vmem:[%s0 + $0x20] sm:$0xff]
  %v16 = vld [vmem:[%s0 + $0x28] sm:$0xff]
  %v17 = vld [vmem:[%s0 + $0x30] sm:$0xff]
  %v18 = vld [vmem:[%s0 + $0x38] sm:$0xff]
  %19 = vmax.xlane.f32.xlu0 %v11
  %v20 = vpop.xlane.xlu0 %19
  %21 = vmax.xlane.f32.xlu0 %v12
  %v22 = vpop.xlane.xlu0 %21
  %23 = vmax.xlane.f32.xlu0 %v13
  %v24 = vpop.xlane.xlu0 %23
  %25 = vmax.xlane.f32.xlu0 %v14
  %v26 = vpop.xlane.xlu0 %25
  %27 = vmax.xlane.f32.xlu0 %v15
  %v28 = vpop.xlane.xlu0 %27
  %29 = vmax.xlane.f32.xlu0 %v16
  %v30 = vpop.xlane.xlu0 %29
  %31 = vmax.xlane.f32.xlu0 %v17
  %v32 = vpop.xlane.xlu0 %31
  %33 = vmax.xlane.f32.xlu0 %v18
  %v34 = vpop.xlane.xlu0 %33
  %v35 = vsub.f32 %v11, %v20
  %v36 = vsub.f32 %v12, %v22
  %v37 = vsub.f32 %v13, %v24
  %v38 = vsub.f32 %v14, %v26
  %v39 = vsub.f32 %v15, %v28
  %v40 = vsub.f32 %v16, %v30
  %v41 = vsub.f32 %v17, %v32
  %v42 = vsub.f32 %v18, %v34
  %v43 = vmul.f32 %v35, 1.442695
  %v44 = vpow.pop %v43
  %v45 = vmul.f32 %v36, 1.442695
  %v46 = vpow.pop %v45
  %v47 = vmul.f32 %v37, 1.442695
  %v48 = vpow.pop %v47
  %v49 = vmul.f32 %v38, 1.442695
  %v50 = vpow.pop %v49
  %v51 = vmul.f32 %v39, 1.442695
  %v52 = vpow.pop %v51
  %v53 = vmul.f32 %v40, 1.442695
  %v54 = vpow.pop %v53
  %v55 = vmul.f32 %v41, 1.442695
  %v56 = vpow.pop %v55
  %v57 = vmul.f32 %v42, 1.442695
  %v58 = vpow.pop %v57
  %59 = vadd.xlane.f32.xlu0 %v44
  %v60 = vpop.xlane.xlu0 %59
  %61 = vadd.xlane.f32.xlu0 %v46
  %v62 = vpop.xlane.xlu0 %61
  %63 = vadd.xlane.f32.xlu0 %v48
  %v64 = vpop.xlane.xlu0 %63
  %65 = vadd.xlane.f32.xlu0 %v50
  %v66 = vpop.xlane.xlu0 %65
  %67 = vadd.xlane.f32.xlu0 %v52
  %v68 = vpop.xlane.xlu0 %67
  %69 = vadd.xlane.f32.xlu0 %v54
  %v70 = vpop.xlane.xlu0 %69
  %71 = vadd.xlane.f32.xlu0 %v56
  %v72 = vpop.xlane.xlu0 %71
  %73 = vadd.xlane.f32.xlu0 %v58
  %v74 = vpop.xlane.xlu0 %73
  %v75 = vlog2.pop %v60
  %v76 = vmul.f32 %v75, 0.6931472
  %v77 = vlog2.pop %v62
  %v78 = vmul.f32 %v77, 0.6931472
  %v79 = vlog2.pop %v64
  %v80 = vmul.f32 %v79, 0.6931472
  %v81 = vlog2.pop %v66
  %v82 = vmul.f32 %v81, 0.6931472
  %v83 = vlog2.pop %v68
  %v84 = vmul.f32 %v83, 0.6931472
  %v85 = vlog2.pop %v70
  %v86 = vmul.f32 %v85, 0.6931472
  %v87 = vlog2.pop %v72
  %v88 = vmul.f32 %v87, 0.6931472
  %v89 = vlog2.pop %v74
  %v90 = vmul.f32 %v89, 0.6931472
  %v91 = vld [vmem:[%s1] sm:$0xff]
  %v92 = vld [vmem:[%s1 + $0x8] sm:$0xff]
  %v93 = vld [vmem:[%s1 + $0x10] sm:$0xff]
  %v94 = vld [vmem:[%s1 + $0x18] sm:$0xff]
  %v95 = vld [vmem:[%s1 + $0x20] sm:$0xff]
  %v96 = vld [vmem:[%s1 + $0x28] sm:$0xff]
  %v97 = vld [vmem:[%s1 + $0x30] sm:$0xff]
  %v98 = vld [vmem:[%s1 + $0x38] sm:$0xff]
  %v99 = vlaneseq
  %v100 = vand.u32 %v99, 127
  %101 = vset.pattern.permute.xlu0 0
  %102 = vperm.xlu0 %101, %v91
  %v103 = vpop.permute.xlu0 %102
  %104 = vset.pattern.permute.xlu0 0
  %105 = vperm.xlu0 %104, %v92
  %v106 = vpop.permute.xlu0 %105
  %107 = vset.pattern.permute.xlu0 0
  %108 = vperm.xlu0 %107, %v93
  %v109 = vpop.permute.xlu0 %108
  %110 = vset.pattern.permute.xlu0 0
  %111 = vperm.xlu0 %110, %v94
  %v112 = vpop.permute.xlu0 %111
  %113 = vset.pattern.permute.xlu0 0
  %114 = vperm.xlu0 %113, %v95
  %v115 = vpop.permute.xlu0 %114
  %116 = vset.pattern.permute.xlu0 0
  %117 = vperm.xlu0 %116, %v96
  %v118 = vpop.permute.xlu0 %117
  %119 = vset.pattern.permute.xlu0 0
  %120 = vperm.xlu0 %119, %v97
  %v121 = vpop.permute.xlu0 %120
  %122 = vset.pattern.permute.xlu0 0
  %123 = vperm.xlu0 %122, %v98
  %v124 = vpop.permute.xlu0 %123
  %vm125 = vcmp.eq.s32.totalorder %v100, %v103
  %vm126 = vcmp.eq.s32.totalorder %v100, %v106
  %vm127 = vcmp.eq.s32.totalorder %v100, %v109
  %vm128 = vcmp.eq.s32.totalorder %v100, %v112
  %vm129 = vcmp.eq.s32.totalorder %v100, %v115
  %vm130 = vcmp.eq.s32.totalorder %v100, %v118
  %vm131 = vcmp.eq.s32.totalorder %v100, %v121
  %vm132 = vcmp.eq.s32.totalorder %v100, %v124
  %v133 = vsel %vm125, %v35, 0.0
  %v134 = vsel %vm126, %v36, 0.0
  %v135 = vsel %vm127, %v37, 0.0
  %v136 = vsel %vm128, %v38, 0.0
  %v137 = vsel %vm129, %v39, 0.0
  %v138 = vsel %vm130, %v40, 0.0
  %v139 = vsel %vm131, %v41, 0.0
  %v140 = vsel %vm132, %v42, 0.0
  %141 = vadd.xlane.f32.xlu0 %v133
  %v142 = vpop.xlane.xlu0 %141
  %143 = vadd.xlane.f32.xlu0 %v134
  %v144 = vpop.xlane.xlu0 %143
  %145 = vadd.xlane.f32.xlu0 %v135
  %v146 = vpop.xlane.xlu0 %145
  %147 = vadd.xlane.f32.xlu0 %v136
  %v148 = vpop.xlane.xlu0 %147
  %149 = vadd.xlane.f32.xlu0 %v137
  %v150 = vpop.xlane.xlu0 %149
  %151 = vadd.xlane.f32.xlu0 %v138
  %v152 = vpop.xlane.xlu0 %151
  %153 = vadd.xlane.f32.xlu0 %v139
  %v154 = vpop.xlane.xlu0 %153
  %155 = vadd.xlane.f32.xlu0 %v140
  %v156 = vpop.xlane.xlu0 %155
  %157 = vadd.xlane.f32.xlu0 %v35
  %v158 = vpop.xlane.xlu0 %157
  %159 = vadd.xlane.f32.xlu0 %v36
  %v160 = vpop.xlane.xlu0 %159
  %161 = vadd.xlane.f32.xlu0 %v37
  %v162 = vpop.xlane.xlu0 %161
  %163 = vadd.xlane.f32.xlu0 %v38
  %v164 = vpop.xlane.xlu0 %163
  %165 = vadd.xlane.f32.xlu0 %v39
  %v166 = vpop.xlane.xlu0 %165
  %167 = vadd.xlane.f32.xlu0 %v40
  %v168 = vpop.xlane.xlu0 %167
  %169 = vadd.xlane.f32.xlu0 %v41
  %v170 = vpop.xlane.xlu0 %169
  %171 = vadd.xlane.f32.xlu0 %v42
  %v172 = vpop.xlane.xlu0 %171
  %v173 = vmul.f32 %v142, 0.9
  %v174 = vmul.f32 %v144, 0.9
  %v175 = vmul.f32 %v146, 0.9
  %v176 = vmul.f32 %v148, 0.9
  %v177 = vmul.f32 %v150, 0.9
  %v178 = vmul.f32 %v152, 0.9
  %v179 = vmul.f32 %v154, 0.9
  %v180 = vmul.f32 %v156, 0.9
  %v181 = vmul.f32 %v158, 0.00078125
  %v182 = vmul.f32 %v160, 0.00078125
  %v183 = vmul.f32 %v162, 0.00078125
  %v184 = vmul.f32 %v164, 0.00078125
  %v185 = vmul.f32 %v166, 0.00078125
  %v186 = vmul.f32 %v168, 0.00078125
  %v187 = vmul.f32 %v170, 0.00078125
  %v188 = vmul.f32 %v172, 0.00078125
  %v189 = vadd.f32 %v173, %v181
  %v190 = vadd.f32 %v174, %v182
  %v191 = vadd.f32 %v175, %v183
  %v192 = vadd.f32 %v176, %v184
  %v193 = vadd.f32 %v177, %v185
  %v194 = vadd.f32 %v178, %v186
  %v195 = vadd.f32 %v179, %v187
  %v196 = vadd.f32 %v180, %v188
  %v197 = vsub.f32 %v76, %v189
  %v198 = vsub.f32 %v78, %v190
  %v199 = vsub.f32 %v80, %v191
  %v200 = vsub.f32 %v82, %v192
  %v201 = vsub.f32 %v84, %v193
  %v202 = vsub.f32 %v86, %v194
  %v203 = vsub.f32 %v88, %v195
  %v204 = vsub.f32 %v90, %v196
  %vm205 = vcmask 7168
  %206 = vst.msk [vmem:[%s2] sm:$0xff] %vm205, %v197
  %207 = vst.msk [vmem:[%s2 + $0x8] sm:$0xff] %vm205, %v198
  %208 = vst.msk [vmem:[%s2 + $0x10] sm:$0xff] %vm205, %v199
  %209 = vst.msk [vmem:[%s2 + $0x18] sm:$0xff] %vm205, %v200
  %210 = vst.msk [vmem:[%s2 + $0x20] sm:$0xff] %vm205, %v201
  %211 = vst.msk [vmem:[%s2 + $0x28] sm:$0xff] %vm205, %v202
  %212 = vst.msk [vmem:[%s2 + $0x30] sm:$0xff] %vm205, %v203
  %213 = vst.msk [vmem:[%s2 + $0x38] sm:$0xff] %vm205, %v204
  // Predicated region
  $region10: #{tpu_custom_call.1} parent=0 // pred_check
    _
  $region11: #{tpu_custom_call.1} parent=0 // pred_check_branch
    %215 = sbr.rel (0) target = $region13
  $region12: #{tpu_custom_call.1} parent=0 // pred_region
    _
  $region13: #{tpu_custom_call.1} parent=0 // pred_fallthru
    _
  // Predicated region
  $region14: #{tpu_custom_call.1} parent=0 // pred_check
    _
  $region15: #{tpu_custom_call.1} parent=0 // pred_check_branch
    %217 = sbr.rel (0) target = $region17
  $region16: #{tpu_custom_call.1} parent=0 // pred_region
    _
  $region17: #{tpu_custom_call.1} parent=0 // pred_fallthru
    _

</llo_original>
